<compile_context>
chip_gen: v7x
topology: tpu7x:2x2x1
jax: 0.10.0
libtpu: 0.0.40
codegen_flags: <defaults>
</compile_context>

<pallas_src>
import jax
import jax.numpy as jnp
from jax.experimental import pallas as pl
from jax.experimental.pallas import tpu as pltpu


def _round_up(x, m):
    return ((x + m - 1) // m) * m


def _pick_tile(dim, cap, align):
    """Tile size: multiple of `align`, <= cap, as large as possible while
    keeping padding waste <= ~12.5% (falls back to the least-waste tile)."""
    dim_pad = _round_up(dim, align)
    cap = max(align, (cap // align) * align)
    if dim_pad <= cap:
        return dim_pad
    best_t, best_waste = cap, None
    for t in range(cap, align - 1, -align):
        waste = _round_up(dim_pad, t) - dim_pad
        if waste <= dim_pad // 8:          # <=12.5% padding: take largest such tile
            return t
        if best_waste is None or waste < best_waste:
            best_t, best_waste = t, waste
    return best_t


def _device_tile_caps():
    """Generation-aware tile caps & VMEM budget (v5e / v6e / v7x)."""
    kind = ""
    try:
        kind = jax.devices()[0].device_kind.lower()
    except Exception:
        pass
    if "v5 lite" in kind or "v5e" in kind or "v5litepod" in kind:
        # v5e: ~240 flop/B crossover -> 512 bf16 tiles are already
        # compute-bound; bigger tk just amortizes per-step overhead.
        return {"cap_m": 512, "cap_n": 512, "cap_k": 1024,
                "vmem_limit": 48 * 1024 * 1024}
    if "v6" in kind:
        # v6e: 128 MiB VMEM, ~650 flop/B crossover -> grow the output tile.
        return {"cap_m": 2048, "cap_n": 2048, "cap_k": 512,
                "vmem_limit": 100 * 1024 * 1024}
    # v7x (and unknown): only 64 MiB VMEM per TensorCore; budget against ~52 MiB
    # (double-buffered output is what bites here).
    return {"cap_m": 2048, "cap_n": 1024, "cap_k": 512,
            "vmem_limit": 52 * 1024 * 1024}


# --------------------------------------------------------------------------
# Kernels
# --------------------------------------------------------------------------
def _td_linear_kernel_1k(x_ref, w_ref, b_ref, o_ref):
    """Single-K fast path: one (tm, tn) output tile, no accumulator scratch.

    x_ref: (tm, K)  w_ref: (K, tn)  b_ref: (1, tn) f32  o_ref: (tm, tn)
    """
    acc = jnp.dot(x_ref[...], w_ref[...], preferred_element_type=jnp.float32)
    o_ref[...] = (acc + b_ref[...].astype(jnp.float32)).astype(o_ref.dtype)


def _td_linear_kernel_acc(x_ref, w_ref, b_ref, o_ref, acc_ref):
    """Multi-K path: accumulate over the K grid axis in an f32 VMEM scratch."""
    k = pl.program_id(2)

    @pl.when(k == 0)
    def _():
        # Fuse the bias into the accumulator init -> hot loop is pure matmul.
        acc_ref[...] = jnp.broadcast_to(
            b_ref[...].astype(jnp.float32), acc_ref.shape)

    acc_ref[...] += jnp.dot(x_ref[...], w_ref[...],
                            preferred_element_type=jnp.float32)

    @pl.when(k == pl.num_programs(2) - 1)
    def _():
        o_ref[...] = acc_ref[...].astype(o_ref.dtype)


def _call_gemm(x2, w_t, b2, *, tm, tn, tk, M_pad, N_pad, K_pad,
               out_dtype, vmem_limit):
    grid_m = M_pad // tm
    grid_n = N_pad // tn
    grid_k = K_pad // tk

    comp_isz = jnp.dtype(x2.dtype).itemsize
    out_isz = jnp.dtype(out_dtype).itemsize
    # Honest byte count: x is re-read once per N block, w once per M block.
    cost = pl.CostEstimate(
        flops=2 * M_pad * K_pad * N_pad,
        transcendentals=0,
        bytes_accessed=((M_pad * K_pad * grid_n + K_pad * N_pad * grid_m)
                        * comp_isz + M_pad * N_pad * out_isz),
    )

    if grid_k == 1:
        # 2-D all-parallel grid: no K axis, no accumulator round-trip.
        return pl.pallas_call(
            _td_linear_kernel_1k,
            out_shape=jax.ShapeDtypeStruct((M_pad, N_pad), out_dtype),
            grid_spec=pltpu.PrefetchScalarGridSpec(
                num_scalar_prefetch=0,
                grid=(grid_m, grid_n),
                in_specs=[
                    pl.BlockSpec((tm, K_pad), lambda i, j: (i, 0)),   # x tile
                    pl.BlockSpec((K_pad, tn), lambda i, j: (0, j)),   # weight
                    pl.BlockSpec((1, tn), lambda i, j: (0, j)),       # bias
                ],
                out_specs=pl.BlockSpec((tm, tn), lambda i, j: (i, j)),
            ),
            compiler_params=pltpu.CompilerParams(
                dimension_semantics=("parallel", "parallel"),
                vmem_limit_bytes=vmem_limit,
            ),
            cost_estimate=cost,
        )(x2, w_t, b2)

    # 3-D grid, K last ("arbitrary"), f32 accumulator scratch.
    # (If still DMA-exposed on v7x, pipeline_mode=pl.Buffered(3) on the x spec
    # can hide the x refetch at each (i, j) boundary.)
    return pl.pallas_call(
        _td_linear_kernel_acc,
        out_shape=jax.ShapeDtypeStruct((M_pad, N_pad), out_dtype),
        grid_spec=pltpu.PrefetchScalarGridSpec(
            num_scalar_prefetch=0,
            grid=(grid_m, grid_n, grid_k),
            in_specs=[
                pl.BlockSpec((tm, tk), lambda i, j, k: (i, k)),   # x tile
                pl.BlockSpec((tk, tn), lambda i, j, k: (k, j)),   # weight tile
                pl.BlockSpec((1, tn), lambda i, j, k: (0, j)),    # bias tile
            ],
            out_specs=pl.BlockSpec((tm, tn), lambda i, j, k: (i, j)),
            scratch_shapes=[pltpu.VMEM((tm, tn), jnp.float32)],
        ),
        compiler_params=pltpu.CompilerParams(
            dimension_semantics=("parallel", "parallel", "arbitrary"),
            vmem_limit_bytes=vmem_limit,
        ),
        cost_estimate=cost,
    )(x2, w_t, b2)


# --------------------------------------------------------------------------
# Public wrappers
# --------------------------------------------------------------------------
def make_time_distributed_linear(weight, bias, *, compute_dtype=jnp.bfloat16,
                                 out_dtype=None):
    """One-time parameter prep (transpose + pad + cast) -> jitted apply(x).

    weight: (F_OUT, F_IN) in PyTorch nn.Linear layout; bias: (F_OUT,).
    Returned apply(x): (B, T, F_IN) -> (B, T, F_OUT) in out_dtype (default
    x.dtype).  compute_dtype=bf16 (default) feeds the MXU at native rate while
    accumulating in f32; pass jnp.float32 for bit-faithful f32 results.
    """
    F_out, F_in = weight.shape
    caps = _device_tile_caps()
    tn = _pick_tile(F_out, caps["cap_n"], 128)
    tk = _pick_tile(F_in, caps["cap_k"], 128)
    N_pad = _round_up(F_out, tn)
    K_pad = _round_up(F_in, tk)

    # Hoisted layout plumbing: weight stored once as (K_pad, N_pad) in the
    # compute dtype, bias once as (1, N_pad) f32.
    w_t = weight.T.astype(compute_dtype)
    if (K_pad, N_pad) != (F_in, F_out):
        w_t = jnp.pad(w_t, ((0, K_pad - F_in), (0, N_pad - F_out)))
    b2 = bias.astype(jnp.float32).reshape(1, F_out)
    if N_pad != F_out:
        b2 = jnp.pad(b2, ((0, 0), (0, N_pad - F_out)))

    @jax.jit
    def apply(x):
        B, T, f_in = x.shape
        assert f_in == F_in, "x feature dim must match weight fan-in"
        M = B * T
        odtype = out_dtype if out_dtype is not None else x.dtype
        tm = _pick_tile(M, caps["cap_m"], 16)
        M_pad = _round_up(M, tm)

        x2 = x.reshape(M, F_in).astype(compute_dtype)   # fold (B, T) -> M
        if (M_pad, K_pad) != (M, F_in):                  # pad only when needed
            x2 = jnp.pad(x2, ((0, M_pad - M), (0, K_pad - F_in)))

        out2 = _call_gemm(x2, w_t, b2, tm=tm, tn=tn, tk=tk,
                          M_pad=M_pad, N_pad=N_pad, K_pad=K_pad,
                          out_dtype=odtype, vmem_limit=caps["vmem_limit"])

        if (M_pad, N_pad) != (M, F_out):
            out2 = out2[:M, :F_out]
        return out2.reshape(B, T, F_out)                 # unfold -> (B, T, F_OUT)

    return apply


def time_distributed_linear(x, weight, bias, **kwargs):
    """Convenience one-shot wrapper.  Prefer make_time_distributed_linear for
    repeated calls so the weight prep happens once."""
    return make_time_distributed_linear(weight, bias, **kwargs)(x)


# --------------------------------------------------------------------------
if __name__ == "__main__":
    # Small shapes consistent with the module's forward: (batch, time, features)
    B, T, F_IN, F_OUT = 2, 8, 32, 32

    key = jax.random.PRNGKey(0)
    kx, kw, kb = jax.random.split(key, 3)

    x = jax.random.normal(kx, (B, T, F_IN), dtype=jnp.float32)

    # Deterministic PyTorch-style Linear init: U(-1/sqrt(fan_in), 1/sqrt(fan_in))
    bound = 1.0 / (F_IN ** 0.5)
    weight = jax.random.uniform(kw, (F_OUT, F_IN), jnp.float32, -bound, bound)
    bias = jax.random.uniform(kb, (F_OUT,), jnp.float32, -bound, bound)

    # Pure-JAX reference of the TimeDistributed(Linear) forward
    ref = (x.reshape(B * T, F_IN) @ weight.T + bias).reshape(B, T, F_OUT)

    # Default production path: bf16 MXU compute, f32 accumulate.
    td_bf16 = make_time_distributed_linear(weight, bias)
    out_bf16 = jax.block_until_ready(td_bf16(x))
    assert out_bf16.shape == (B, T, F_OUT)
    assert jnp.allclose(out_bf16, ref, atol=3e-2, rtol=3e-2)

    # f32 compute path: bit-level agreement with the reference.
    td_f32 = make_time_distributed_linear(weight, bias,
                                          compute_dtype=jnp.float32)
    out_f32 = jax.block_until_ready(td_f32(x))
    assert out_f32.shape == (B, T, F_OUT)
    assert jnp.allclose(out_f32, ref, atol=1e-5, rtol=1e-5)

    print("KERNEL_OK")
</pallas_src>

<mosaic_0001>
module attributes {stable_mosaic.version = 11 : i64} {
  func.func @_td_linear_kernel_1k(%arg0: i32, %arg1: i32, %arg2: memref<16x128xbf16, #tpu.memory_space<vmem>>, %arg3: memref<128x128xbf16, #tpu.memory_space<vmem>>, %arg4: memref<1x128xf32, #tpu.memory_space<vmem>>, %arg5: memref<16x128xf32, #tpu.memory_space<vmem>>) attributes {dimension_semantics = [#tpu.dimension_semantics<parallel>, #tpu.dimension_semantics<parallel>], iteration_bounds = array<i64: 1, 1>, scalar_prefetch = 0 : i64, scratch_operands = 0 : i64, tpu.core_type = #tpu.core_type<tc>, window_params = [{transform_indices = @transform_0, window_bounds = array<i64: 16, 128>}, {transform_indices = @transform_1, window_bounds = array<i64: 128, 128>}, {transform_indices = @transform_2, window_bounds = array<i64: 1, 128>}, {transform_indices = @transform_3, window_bounds = array<i64: 16, 128>}]} {
    %c0 = arith.constant 0 : index
    %c0_0 = arith.constant 0 : index
    %0 = vector.load %arg2[%c0, %c0_0] : memref<16x128xbf16, #tpu.memory_space<vmem>>, vector<16x128xbf16>
    %c0_1 = arith.constant 0 : index
    %c0_2 = arith.constant 0 : index
    %1 = vector.load %arg3[%c0_1, %c0_2] : memref<128x128xbf16, #tpu.memory_space<vmem>>, vector<128x128xbf16>
    %cst = arith.constant dense<0.000000e+00> : vector<16x128xf32>
    %2 = tpu.matmul %0, %1, %cst {dimension_numbers = #tpu.dot_dimension_numbers<[1], [0], [0], [1], [0, 0, 1, 1], [], []>} : vector<16x128xbf16>, vector<128x128xbf16>, vector<16x128xf32> -> vector<16x128xf32>
    %c0_3 = arith.constant 0 : index
    %c0_4 = arith.constant 0 : index
    %3 = vector.load %arg4[%c0_3, %c0_4] : memref<1x128xf32, #tpu.memory_space<vmem>>, vector<1x128xf32>
    %4 = vector.broadcast %3 : vector<1x128xf32> to vector<16x128xf32>
    %5 = arith.addf %2, %4 : vector<16x128xf32>
    %c0_5 = arith.constant 0 : index
    %c0_6 = arith.constant 0 : index
    %6 = vector.load %arg5[%c0_5, %c0_6] : memref<16x128xf32, #tpu.memory_space<vmem>>, vector<16x128xf32>
    tpu.vector_store %arg5[%c0_5, %c0_6], %5 {strides = array<i32>} : memref<16x128xf32, #tpu.memory_space<vmem>>, vector<16x128xf32>,
    return
  }
  func.func @transform_0(%arg0: i32, %arg1: i32) -> (i32, i32) {
    %c0_i32 = arith.constant 0 : i32
    %c0_i32_0 = arith.constant 0 : i32
    return %arg0, %c0_i32 : i32, i32
  }
  func.func @transform_1(%arg0: i32, %arg1: i32) -> (i32, i32) {
    %c0_i32 = arith.constant 0 : i32
    %c0_i32_0 = arith.constant 0 : i32
    return %c0_i32, %arg1 : i32, i32
  }
  func.func @transform_2(%arg0: i32, %arg1: i32) -> (i32, i32) {
    %c0_i32 = arith.constant 0 : i32
    %c0_i32_0 = arith.constant 0 : i32
    return %c0_i32, %arg1 : i32, i32
  }
  func.func @transform_3(%arg0: i32, %arg1: i32) -> (i32, i32) {
    %c0_i32 = arith.constant 0 : i32
    return %arg0, %arg1 : i32, i32
  }
}

</mosaic_0001>

<llo_original>
// kernel: apply.1
$region0: #{apply.1}
  #allocation0 [shape = 'u32[]', space=smem, size = 0x4, offset = 0x4, fixed_abs, tag = 'smem constant byte address 0x4 - core index']
  #allocation1 [shape = 'u32[144,128]{1,0:T(1,128)}', space=vmem, size = 0x12000, scoped, tag = 'internal scratch']
  %s0 = inlined_call_operand.vmem [shape: bf16[16,128], index: 0, kind: input, shape index: {}]
  %s1 = inlined_call_operand.hbm [shape: bf16[128,128], index: 1, kind: input, shape index: {}]
  %s2 = inlined_call_operand.vmem [shape: f32[1,128], index: 2, kind: input, shape index: {}]
  %s3 = inlined_call_operand.vmem [shape: f32[16,128], index: 3, kind: output, shape index: {}]
  %s4 = sld [smem:[#allocation0]]
  $region26: #{apply.1} parent=0
    _
  %s6 = ssub.s32 1, %s4
  %s7 = scalar_select 0, %s6, %s4
  $region1: #{apply.1} parent=0
    #allocation2 [shape = 'u8[32768]{0}', space=vmem, size = 0x8000, scoped, tag = 'input window, operand 1, single buffered']
    #allocation3 [shape = 's32[1]{0}', space=sflag, size = 0x4, scoped, tag = 'scoped memory for apply.1']
    %8 = vsyncpa [#allocation3], 0
    // Predicated region
    $region2: #{apply.1} parent=1 // pred_check
      _
    $region3: #{apply.1} parent=1 // pred_check_branch
      %10 = sbr.rel (0) target = $region5
    $region4: #{apply.1} parent=1 // pred_region
      _
    $region5: #{apply.1} parent=1 // pred_fallthru
      _
    // Predicated region
    $region6: #{apply.1} parent=1 // pred_check
      _
    $region7: #{apply.1} parent=1 // pred_check_branch
      %12 = sbr.rel (0) target = $region9
    $region8: #{apply.1} parent=1 // pred_region
      %s14 = ssub.s32 1024, 1024
      %15 = vsyncadd [#allocation3], %s14
      %s16 = sshll.u32 [#allocation2], 4
      %s17 = int_to_ptr.vmem [resolvable:$true] %s16
      %22 = dma.hbm_to_vmem [thread:$0]  %s1, 1024, %s17, [#allocation3], 64, 64, 4
    $region9: #{apply.1} parent=1 // pred_fallthru
      _
    // Predicated region
    $region10: #{apply.1} parent=1 // pred_check
      _
    $region11: #{apply.1} parent=1 // pred_check_branch
      %24 = sbr.rel (0) target = $region13
    $region12: #{apply.1} parent=1 // pred_region
      _
    $region13: #{apply.1} parent=1 // pred_fallthru
      _
    // Predicated region
    $region14: #{apply.1} parent=1 // pred_check
      _
    $region15: #{apply.1} parent=1 // pred_check_branch
      %26 = sbr.rel (0) target = $region17
    $region16: #{apply.1} parent=1 // pred_region
      %27 = dma.done [#allocation3], 1024
    $region17: #{apply.1} parent=1 // pred_fallthru
      _
    %v29 = vld [vmem:[%s0] sm:$0xf]
    %v30 = vld [vmem:[%s0 + $0x4] sm:$0xf]
    %v31 = vld [vmem:[#allocation2] sm:$0xf]
    %v32 = vld [vmem:[#allocation2 + $0x4] sm:$0xf]
    %v33 = vld [vmem:[#allocation2 + $0x8] sm:$0xf]
    %v34 = vld [vmem:[#allocation2 + $0xc] sm:$0xf]
    %v35 = vld [vmem:[#allocation2 + $0x10] sm:$0xf]
    %v36 = vld [vmem:[#allocation2 + $0x14] sm:$0xf]
    %v37 = vld [vmem:[#allocation2 + $0x18] sm:$0xf]
    %v38 = vld [vmem:[#allocation2 + $0x1c] sm:$0xf]
    %v39 = vld [vmem:[#allocation2 + $0x20] sm:$0xf]
    %v40 = vld [vmem:[#allocation2 + $0x24] sm:$0xf]
    %v41 = vld [vmem:[#allocation2 + $0x28] sm:$0xf]
    %v42 = vld [vmem:[#allocation2 + $0x2c] sm:$0xf]
    %v43 = vld [vmem:[#allocation2 + $0x30] sm:$0xf]
    %v44 = vld [vmem:[#allocation2 + $0x34] sm:$0xf]
    %v45 = vld [vmem:[#allocation2 + $0x38] sm:$0xf]
    %v46 = vld [vmem:[#allocation2 + $0x3c] sm:$0xf]
    %v47 = vld [vmem:[%s2] sm:$0x1]
    %v49 = vlaneseq
    %v50 = vshrl.u32 %v49, 7
    %v51 = vsub.s32 0, %v50
    %v52 = vrot.slane %v47, %v51
    %v56 = vunpack.c.l.b16 %v29
    %v57 = vunpack.c.l.b16 %v30
    %v58 = vpack.c.b16 %v57, %v56
    %v76 = vunpack.c.l.b16 %v31
    %v77 = vunpack.c.l.b16 %v32
    %v78 = vunpack.c.l.b16 %v33
    %v79 = vunpack.c.l.b16 %v34
    %v80 = vunpack.c.l.b16 %v35
    %v81 = vunpack.c.l.b16 %v36
    %v82 = vunpack.c.l.b16 %v37
    %v83 = vunpack.c.l.b16 %v38
    %v84 = vunpack.c.l.b16 %v39
    %v85 = vunpack.c.l.b16 %v40
    %v86 = vunpack.c.l.b16 %v41
    %v87 = vunpack.c.l.b16 %v42
    %v88 = vunpack.c.l.b16 %v43
    %v89 = vunpack.c.l.b16 %v44
    %v90 = vunpack.c.l.b16 %v45
    %v91 = vunpack.c.l.b16 %v46
    %v92 = vpack.c.b16 %v77, %v76
    %v93 = vpack.c.b16 %v79, %v78
    %v94 = vpack.c.b16 %v81, %v80
    %v95 = vpack.c.b16 %v83, %v82
    %v96 = vpack.c.b16 %v85, %v84
    %v97 = vpack.c.b16 %v87, %v86
    %v98 = vpack.c.b16 %v89, %v88
    %v99 = vpack.c.b16 %v91, %v90
    %108 = vmatprep.subr.bf16.mxu0 0
    %109 = vmatpush1.bf16.msra.mxu0 %v92
    %110 = vmatprep.subr.bf16.mxu0 0
    %111 = vmatpush1.bf16.msra.mxu0 %v93
    %112 = vmatprep.subr.bf16.mxu0 0
    %113 = vmatpush1.bf16.msra.mxu0 %v94
    %114 = vmatprep.subr.bf16.mxu0 0
    %115 = vmatpush1.bf16.msra.mxu0 %v95
    %116 = vmatprep.subr.bf16.mxu0 0
    %117 = vmatpush1.bf16.msra.mxu0 %v96
    %118 = vmatprep.subr.bf16.mxu0 0
    %119 = vmatpush1.bf16.msra.mxu0 %v97
    %120 = vmatprep.subr.bf16.mxu0 0
    %121 = vmatpush1.bf16.msra.mxu0 %v98
    %122 = vmatprep.subr.bf16.mxu0 0
    %123 = vmatpush1.bf16.msra.mxu0 %v99
    %124 = vmatprep.subr.bf16.mxu0 0
    %125 = vmatpush1.bf16.msra.mxu0 0
    %126 = vmatprep.subr.bf16.mxu0 0
    %127 = vmatpush1.bf16.msra.mxu0 0
    %128 = vmatprep.subr.bf16.mxu0 0
    %129 = vmatpush1.bf16.msra.mxu0 0
    %130 = vmatprep.subr.bf16.mxu0 0
    %131 = vmatpush1.bf16.msra.mxu0 0
    %132 = vmatprep.subr.bf16.mxu0 0
    %133 = vmatpush1.bf16.msra.mxu0 0
    %134 = vmatprep.subr.bf16.mxu0 0
    %135 = vmatpush1.bf16.msra.mxu0 0
    %136 = vmatprep.subr.bf16.mxu0 0
    %137 = vmatpush1.bf16.msra.mxu0 0
    %138 = vmatprep.subr.bf16.mxu0 0
    %139 = vmatpush1.bf16.msra.mxu0 0
    %140 = vmatprep.mubr.bf16.mxu0 0
    %141 = vmatmul.mubr.bf16.gmra.mrb[0].mxu0 %v58
    %v142 = vpop.f32.mrb[0].mxu0
    %v143 = vadd.f32 %v52, %v142
    %v144 = vpop.f32.mrb[0].mxu0
    %v145 = vpop.f32.mrb[0].mxu0
    %v146 = vadd.f32 %v52, %v145
    %v147 = vpop.f32.mrb[0].mxu0
    %148 = vdwg.mxu0
    %149 = vst [vmem:[%s3] sm:$0xff] %v143
    %150 = vst [vmem:[%s3 + $0x8] sm:$0xff] %v146
    // Predicated region
    $region18: #{apply.1} parent=1 // pred_check
      _
    $region19: #{apply.1} parent=1 // pred_check_branch
      %152 = sbr.rel (0) target = $region21
    $region20: #{apply.1} parent=1 // pred_region
      _
    $region21: #{apply.1} parent=1 // pred_fallthru
      _
    // Predicated region
    $region22: #{apply.1} parent=1 // pred_check
      _
    $region23: #{apply.1} parent=1 // pred_check_branch
      %154 = sbr.rel (0) target = $region25
    $region24: #{apply.1} parent=1 // pred_region
      _
    $region25: #{apply.1} parent=1 // pred_fallthru
      _
    %155 = vsyncpa [#allocation3], 1

</llo_original>
